<compile_context>
chip_gen: v5e
topology: v5e:2x2
jax: 0.10.0
libtpu: 0.0.40
codegen_flags: <defaults>
</compile_context>

<pallas_src>
import functools
import math

import jax
import jax.numpy as jnp
from jax.experimental import pallas as pl
from jax.experimental.pallas import tpu as pltpu

_ROW_ALIGN = 32                      # sublane multiple valid for f32/bf16/8-bit tiles
_SMALL_ROWS = 512                    # <= this many lane-rows -> single-block fast path
_TARGET_BLOCK_BYTES = 4 * 1024 * 1024  # per-input, per-pipeline-buffer budget
_MAX_BLOCK_ROWS = 4096


def _round_up(x, m):
    return ((x + m - 1) // m) * m


def _pick_lanes(total):
    # Widest lane tile (multiple of 128) that divides `total`, so the wrapper
    # reshape is a pure bitcast (no pad copy). Falls back to 512 + small pad.
    for lanes in (512, 256, 128):
        if total % lanes == 0:
            return lanes
    return 512


def _sq_frob_kernel(a_ref, b_ref, out_ref, acc_ref, *, scale):
    # grid = (num_splits ["parallel"], steps ["arbitrary" reduction axis])
    i = pl.program_id(1)

    @pl.when(i == 0)
    def _():
        acc_ref[...] = jnp.zeros_like(acc_ref)

    # Hot loop: purely elementwise (VPU). No per-step cross-lane reduce, no
    # per-step read-modify-write of a tiny padded output tile.
    d = a_ref[...].astype(jnp.float32) - b_ref[...].astype(jnp.float32)
    acc_ref[...] += d * d

    # Epilogue: one full reduction + scaling per split, broadcast into the
    # split's (8, 128) output tile (unmasked store).
    @pl.when(i == pl.num_programs(1) - 1)
    def _():
        total_sq = jnp.sum(acc_ref[...]) * jnp.float32(scale)
        out_ref[...] = jnp.zeros_like(out_ref) + total_sq


def squared_frobenius_loss(a, b, loss_weight=1.0):
    """a, b: arrays with ndim >= 2 (last two dims are the matrix dims).

    Returns the scalar float32 loss matching the PyTorch module.
    """
    assert a.shape == b.shape, (a.shape, b.shape)
    assert a.ndim >= 2
    batch = int(math.prod(a.shape[:-2]))  # == 1 for 2-D inputs

    # Complex support: torch.abs(z)**2 == re^2 + im^2, so view the complex
    # arrays as real arrays with a trailing (re, im) axis.
    if jnp.issubdtype(a.dtype, jnp.complexfloating):
        a = jnp.stack([jnp.real(a), jnp.imag(a)], axis=-1)
        b = jnp.stack([jnp.real(b), jnp.imag(b)], axis=-1)

    total = int(math.prod(a.shape))
    lanes = _pick_lanes(total)
    itemsize = jnp.dtype(a.dtype).itemsize
    rows0 = pl.cdiv(total, lanes)

    if rows0 <= _SMALL_ROWS:
        # One block covering the whole (rows0, lanes) array; block dims equal
        # the full array dims so no (8,128) divisibility / row padding needed.
        num_splits, steps, block_rows = 1, 1, rows0
        rows_padded = rows0
    else:
        # Split the row range across TensorCores (2 on v7x; harmless serial
        # loop on 1-TC chips). Block rows sized to ~4 MiB per input buffer.
        num_splits = 2
        max_block_rows = min(
            _MAX_BLOCK_ROWS,
            max(_ROW_ALIGN, _TARGET_BLOCK_BYTES // (lanes * itemsize)))
        steps = pl.cdiv(rows0, num_splits * max_block_rows)
        block_rows = _round_up(pl.cdiv(rows0, num_splits * steps), _ROW_ALIGN)
        rows_padded = num_splits * steps * block_rows

    pad = rows_padded * lanes - total
    a_flat = a.reshape(-1)
    b_flat = b.reshape(-1)
    if pad:
        # Zero padding contributes 0 to the squared-diff sum.
        a_flat = jnp.pad(a_flat, (0, pad))
        b_flat = jnp.pad(b_flat, (0, pad))
    a2 = a_flat.reshape(rows_padded, lanes)
    b2 = b_flat.reshape(rows_padded, lanes)

    scale = float(loss_weight) / float(batch)
    kernel = functools.partial(_sq_frob_kernel, scale=scale)
    in_map = lambda c, i: (c * steps + i, 0)

    cost = pl.CostEstimate(
        flops=3 * total,
        transcendentals=0,
        bytes_accessed=2 * rows_padded * lanes * itemsize + num_splits * 8 * 128 * 4,
    )

    out = pl.pallas_call(
        kernel,
        out_shape=jax.ShapeDtypeStruct((num_splits * 8, 128), jnp.float32),
        grid_spec=pltpu.PrefetchScalarGridSpec(
            num_scalar_prefetch=0,
            grid=(num_splits, steps),
            in_specs=[
                pl.BlockSpec((block_rows, lanes), in_map),
                pl.BlockSpec((block_rows, lanes), in_map),
            ],
            out_specs=pl.BlockSpec((8, 128), lambda c, i: (c, 0)),
            scratch_shapes=[pltpu.VMEM((block_rows, lanes), jnp.float32)],
        ),
        compiler_params=pltpu.CompilerParams(
            dimension_semantics=("parallel", "arbitrary"),
            vmem_limit_bytes=48 * 1024 * 1024,
        ),
        cost_estimate=cost,
    )(a2, b2)

    # Each split's (already scaled) partial is replicated across its (8,128)
    # output tile; pick one element per split and sum.
    return jnp.sum(out[0::8, 0])


if __name__ == "__main__":
    key = jax.random.PRNGKey(0)
    k1, k2, k3, k4, k5, k6, k7, k8 = jax.random.split(key, 8)

    # Case 1: small functional-map-like matrices (f32), single-block fast path.
    B, M, N = 2, 16, 32
    a = jax.random.normal(k1, (B, M, N), dtype=jnp.float32)
    b = jax.random.normal(k2, (B, M, N), dtype=jnp.float32)
    loss = jax.block_until_ready(squared_frobenius_loss(a, b, 1.0))
    ref = 1.0 * jnp.mean(jnp.sum(jnp.abs(a - b) ** 2, axis=(-2, -1)))
    assert jnp.allclose(loss, ref, rtol=1e-5, atol=1e-5), (loss, ref)

    # Case 2: larger bf16 inputs exercising the multi-block / dual-core path.
    B2, M2, N2 = 8, 512, 512
    a2 = jax.random.normal(k3, (B2, M2, N2), jnp.float32).astype(jnp.bfloat16)
    b2 = jax.random.normal(k4, (B2, M2, N2), jnp.float32).astype(jnp.bfloat16)
    loss2 = jax.block_until_ready(squared_frobenius_loss(a2, b2, 0.5))
    a2f, b2f = a2.astype(jnp.float32), b2.astype(jnp.float32)
    ref2 = 0.5 * jnp.mean(jnp.sum((a2f - b2f) ** 2, axis=(-2, -1)))
    assert jnp.allclose(loss2, ref2, rtol=1e-3), (loss2, ref2)

    # Case 3: complex inputs (torch.abs(z)**2 path).
    B3, K3 = 2, 12
    ar = jax.random.normal(k5, (B3, K3, K3), jnp.float32)
    ai = jax.random.normal(k6, (B3, K3, K3), jnp.float32)
    br = jax.random.normal(k7, (B3, K3, K3), jnp.float32)
    bi = jax.random.normal(k8, (B3, K3, K3), jnp.float32)
    ac = ar + 1j * ai
    bc = br + 1j * bi
    loss3 = jax.block_until_ready(squared_frobenius_loss(ac, bc, 2.0))
    ref3 = 2.0 * jnp.mean(jnp.sum(jnp.abs(ac - bc) ** 2, axis=(-2, -1)))
    assert jnp.allclose(loss3, ref3, rtol=1e-5, atol=1e-5), (loss3, ref3)

    print("KERNEL_OK")
</pallas_src>

<mosaic_0001>
module attributes {stable_mosaic.version = 11 : i64} {
  func.func @_sq_frob_kernel(%arg0: i32, %arg1: i32, %arg2: memref<2x512xf32, #tpu.memory_space<vmem>>, %arg3: memref<2x512xf32, #tpu.memory_space<vmem>>, %arg4: memref<8x128xf32, #tpu.memory_space<vmem>>, %arg5: memref<2x512xf32, #tpu.memory_space<vmem>>) attributes {dimension_semantics = [#tpu.dimension_semantics<parallel>, #tpu.dimension_semantics<arbitrary>], iteration_bounds = array<i64: 1, 1>, scalar_prefetch = 0 : i64, scratch_operands = 1 : i64, tpu.core_type = #tpu.core_type<tc>, window_params = [{transform_indices = @transform_0, window_bounds = array<i64: 2, 512>}, {transform_indices = @transform_1, window_bounds = array<i64: 2, 512>}, {transform_indices = @transform_2, window_bounds = array<i64: 8, 128>}]} {
    %c0_i32 = arith.constant 0 : i32
    %0 = arith.cmpi eq, %arg1, %c0_i32 : i32
    %1 = arith.extui %0 : i1 to i32
    %c0_i32_0 = arith.constant 0 : i32
    %2 = arith.cmpi ne, %1, %c0_i32_0 : i32
    scf.if %2 {
      %cst = arith.constant 0.000000e+00 : f32
      %13 = vector.broadcast %cst : f32 to vector<2x512xf32>
      %c0_10 = arith.constant 0 : index
      %c0_11 = arith.constant 0 : index
      %14 = vector.load %arg5[%c0_10, %c0_11] : memref<2x512xf32, #tpu.memory_space<vmem>>, vector<2x512xf32>
      tpu.vector_store %arg5[%c0_10, %c0_11], %13 {strides = array<i32>} : memref<2x512xf32, #tpu.memory_space<vmem>>, vector<2x512xf32>,
    } else {
    }
    %c0 = arith.constant 0 : index
    %c0_1 = arith.constant 0 : index
    %3 = vector.load %arg2[%c0, %c0_1] : memref<2x512xf32, #tpu.memory_space<vmem>>, vector<2x512xf32>
    %c0_2 = arith.constant 0 : index
    %c0_3 = arith.constant 0 : index
    %4 = vector.load %arg3[%c0_2, %c0_3] : memref<2x512xf32, #tpu.memory_space<vmem>>, vector<2x512xf32>
    %5 = arith.subf %3, %4 : vector<2x512xf32>
    %c0_4 = arith.constant 0 : index
    %c0_5 = arith.constant 0 : index
    %6 = vector.load %arg5[%c0_4, %c0_5] : memref<2x512xf32, #tpu.memory_space<vmem>>, vector<2x512xf32>
    %7 = arith.mulf %5, %5 : vector<2x512xf32>
    %8 = arith.addf %6, %7 : vector<2x512xf32>
    %c0_6 = arith.constant 0 : index
    %c0_7 = arith.constant 0 : index
    %9 = vector.load %arg5[%c0_6, %c0_7] : memref<2x512xf32, #tpu.memory_space<vmem>>, vector<2x512xf32>
    tpu.vector_store %arg5[%c0_6, %c0_7], %8 {strides = array<i32>} : memref<2x512xf32, #tpu.memory_space<vmem>>, vector<2x512xf32>,
    %c0_i32_8 = arith.constant 0 : i32
    %10 = arith.cmpi eq, %arg1, %c0_i32_8 : i32
    %11 = arith.extui %10 : i1 to i32
    %c0_i32_9 = arith.constant 0 : i32
    %12 = arith.cmpi ne, %11, %c0_i32_9 : i32
    scf.if %12 {
      %c0_10 = arith.constant 0 : index
      %c0_11 = arith.constant 0 : index
      %13 = vector.load %arg5[%c0_10, %c0_11] : memref<2x512xf32, #tpu.memory_space<vmem>>, vector<2x512xf32>
      %14 = vector.shape_cast %13 : vector<2x512xf32> to vector<1x2x512xf32>
      %cst = arith.constant dense<0.000000e+00> : vector<1xf32>
      %15 = vector.multi_reduction <add>, %14, %cst [1, 2] : vector<1x2x512xf32> to vector<1xf32>
      %16 = vector.shape_cast %15 : vector<1xf32> to vector<1x1x1xf32>
      %17 = vector.extract %16[0, 0, 0] : f32 from vector<1x1x1xf32>
      %cst_12 = arith.constant 5.000000e-01 : f32
      %18 = arith.mulf %17, %cst_12 : f32
      %cst_13 = arith.constant 0.000000e+00 : f32
      %19 = vector.broadcast %cst_13 : f32 to vector<8x128xf32>
      %20 = vector.broadcast %18 : f32 to vector<8x128xf32>
      %21 = arith.addf %19, %20 : vector<8x128xf32>
      %c0_14 = arith.constant 0 : index
      %c0_15 = arith.constant 0 : index
      %22 = vector.load %arg4[%c0_14, %c0_15] : memref<8x128xf32, #tpu.memory_space<vmem>>, vector<8x128xf32>
      tpu.vector_store %arg4[%c0_14, %c0_15], %21 {strides = array<i32>} : memref<8x128xf32, #tpu.memory_space<vmem>>, vector<8x128xf32>,
    } else {
    }
    return
  }
  func.func @transform_0(%arg0: i32, %arg1: i32) -> (i32, i32) {
    %c1_i32 = arith.constant 1 : i32
    %0 = arith.muli %arg0, %c1_i32 : i32
    %1 = arith.addi %0, %arg1 : i32
    %c0_i32 = arith.constant 0 : i32
    %c0_i32_0 = arith.constant 0 : i32
    return %1, %c0_i32 : i32, i32
  }
  func.func @transform_1(%arg0: i32, %arg1: i32) -> (i32, i32) {
    %c1_i32 = arith.constant 1 : i32
    %0 = arith.muli %arg0, %c1_i32 : i32
    %1 = arith.addi %0, %arg1 : i32
    %c0_i32 = arith.constant 0 : i32
    %c0_i32_0 = arith.constant 0 : i32
    return %1, %c0_i32 : i32, i32
  }
  func.func @transform_2(%arg0: i32, %arg1: i32) -> (i32, i32) {
    %c0_i32 = arith.constant 0 : i32
    %c0_i32_0 = arith.constant 0 : i32
    return %arg0, %c0_i32 : i32, i32
  }
}

</mosaic_0001>

<llo_original>
// kernel: tpu_custom_call.1
$region0: #{tpu_custom_call.1}
  #allocation0 [shape = 'u32[]', space=smem, size = 0x4, offset = 0x4, fixed_abs, tag = 'smem constant byte address 0x4 - core index']
  #allocation1 [shape = 'u32[72,128]{1,0:T(1,128)}', space=vmem, size = 0x9000, scoped, tag = 'internal scratch']
  #allocation2 [shape = 'f32[2,512]{1,0:T(2,128)}', space=vmem, size = 0x1000, scoped, tag = 'scratch operand']
  %s0 = inlined_call_operand.hbm [shape: f32[2,512], index: 0, kind: input, shape index: {}]
  %s1 = inlined_call_operand.hbm [shape: f32[2,512], index: 1, kind: input, shape index: {}]
  %s2 = inlined_call_operand.hbm [shape: f32[8,128], index: 2, kind: output, shape index: {}]
  %s3 = sld [smem:[#allocation0]]
  $region34: #{tpu_custom_call.1} parent=0
    _
  %s5 = ssub.s32 1, %s3
  %s6 = scalar_select 0, %s5, %s3
  $region1: #{tpu_custom_call.1} parent=0
    #allocation3 [shape = 'u8[4096]{0}', space=vmem, size = 0x1000, scoped, tag = 'input window, operand 0, single buffered']
    #allocation4 [shape = 's32[1]{0}', space=sflag, size = 0x4, scoped, tag = 'scoped memory for tpu_custom_call.1']
    #allocation5 [shape = 's32[1]{0}', space=sflag, size = 0x4, scoped, tag = 'scoped memory for tpu_custom_call.1']
    #allocation6 [shape = 'u8[4096]{0}', space=vmem, size = 0x1000, scoped, tag = 'input window, operand 1, single buffered']
    #allocation7 [shape = 's32[1]{0}', space=sflag, size = 0x4, scoped, tag = 'scoped memory for tpu_custom_call.1']
    #allocation8 [shape = 'u8[4096]{0}', space=vmem, size = 0x1000, scoped, tag = 'output window, operand 0, single buffered']
    %7 = vsyncpa [#allocation4], 0
    %8 = vsyncpa [#allocation7], 0
    %9 = vsyncpa [#allocation5], 0
    // Predicated region
    $region2: #{tpu_custom_call.1} parent=1 // pred_check
      _
    $region3: #{tpu_custom_call.1} parent=1 // pred_check_branch
      %11 = sbr.rel (0) target = $region5
    $region4: #{tpu_custom_call.1} parent=1 // pred_region
      %s12 = sadd.s32 0, 0
      %14 = vsyncadd [#allocation4], 0
      %s15 = smul.addr %s12, 4
      %s16 = smul.addr %s15, 2
      %s17 = scalar_lea.hbm %s0, %s16
      %s19 = sshll.u32 %s17, 4
      %s20 = int_to_ptr.hbm [resolvable:$true] %s19
      %s21 = sshll.u32 [#allocation3], 4
      %s22 = int_to_ptr.vmem [resolvable:$true] %s21
      %24 = dma.hbm_to_vmem [thread:$0]  %s20, 128, %s22, [#allocation4]
    $region5: #{tpu_custom_call.1} parent=1 // pred_fallthru
      _
    // Predicated region
    $region6: #{tpu_custom_call.1} parent=1 // pred_check
      _
    $region7: #{tpu_custom_call.1} parent=1 // pred_check_branch
      %26 = sbr.rel (0) target = $region9
    $region8: #{tpu_custom_call.1} parent=1 // pred_region
      %s27 = sadd.s32 0, 0
      %29 = vsyncadd [#allocation7], 0
      %s30 = smul.addr %s27, 4
      %s31 = smul.addr %s30, 2
      %s32 = scalar_lea.hbm %s1, %s31
      %s34 = sshll.u32 %s32, 4
      %s35 = int_to_ptr.hbm [resolvable:$true] %s34
      %s36 = sshll.u32 [#allocation6], 4
      %s37 = int_to_ptr.vmem [resolvable:$true] %s36
      %39 = dma.hbm_to_vmem [thread:$0]  %s35, 128, %s37, [#allocation7]
    $region9: #{tpu_custom_call.1} parent=1 // pred_fallthru
      _
    // Predicated region
    $region10: #{tpu_custom_call.1} parent=1 // pred_check
      _
    $region11: #{tpu_custom_call.1} parent=1 // pred_check_branch
      %41 = sbr.rel (0) target = $region13
    $region12: #{tpu_custom_call.1} parent=1 // pred_region
      %43 = dma.done [#allocation4], 128
    $region13: #{tpu_custom_call.1} parent=1 // pred_fallthru
      _
    // Predicated region
    $region14: #{tpu_custom_call.1} parent=1 // pred_check
      _
    $region15: #{tpu_custom_call.1} parent=1 // pred_check_branch
      %45 = sbr.rel (0) target = $region17
    $region16: #{tpu_custom_call.1} parent=1 // pred_region
      %47 = dma.done [#allocation7], 128
    $region17: #{tpu_custom_call.1} parent=1 // pred_fallthru
      _
    %s48 = sadd.s32 0, 0
    %s49 = sadd.s32 0, 0
    %p50 = scmp.eq.s32.totalorder 0, 0
    // Predicated region
    $region18: #{tpu_custom_call.1} parent=1 // pred_check
      %p51 = pneg %p50
    $region19: #{tpu_custom_call.1} parent=1 // pred_check_branch
      %53 = sbr.rel (%p51) target = $region21
    $region20: #{tpu_custom_call.1} parent=1 // pred_region
      %54 = vst [vmem:[#allocation2] sm:$0xff] 0.0
    $region21: #{tpu_custom_call.1} parent=1 // pred_fallthru
      _
    %v55 = vld [vmem:[#allocation3] sm:$0xff]
    %v56 = vld [vmem:[#allocation6] sm:$0xff]
    %v57 = vsub.f32 %v55, %v56
    %v58 = vld [vmem:[#allocation2] sm:$0xff]
    %v59 = vmul.f32 %v57, %v57
    %v60 = vadd.f32 %v58, %v59
    %61 = vst [vmem:[#allocation2] sm:$0xff] %v60
    // Predicated region
    $region22: #{tpu_custom_call.1} parent=1 // pred_check
      %p62 = pneg %p50
    $region23: #{tpu_custom_call.1} parent=1 // pred_check_branch
      %64 = sbr.rel (%p62) target = $region25
    $region24: #{tpu_custom_call.1} parent=1 // pred_region
      %v65 = vld [vmem:[#allocation2] sm:$0xff]
      %67 = vst [vmem:[#allocation1] ss:$4 sm:$0xff] %v65
      %v68 = vld.sshfl [vmem:[#allocation1] sm:$0xff pattern:$0x73625140]
      %v69 = vld.sshfl [vmem:[#allocation1 + $0x8] sm:$0xff pattern:$0x73625140]
      %v70 = vld.sshfl [vmem:[#allocation1 + $0x10] sm:$0xff pattern:$0x73625140]
      %v71 = vld.sshfl [vmem:[#allocation1 + $0x18] sm:$0xff pattern:$0x73625140]
      %vm76 = vcmask 1041408
      %v77 = vsel %vm76, %v68, 0.0
      %v78 = vsel %vm76, %v69, 0.0
      %v79 = vadd.f32 %v77, %v78
      %v80 = vsel %vm76, %v70, 0.0
      %v81 = vadd.f32 %v79, %v80
      %v82 = vsel %vm76, %v71, 0.0
      %v83 = vadd.f32 %v81, %v82
      %84 = vadd.xlane.f32.xlu0 %v83
      %v85 = vpop.xlane.xlu0 %84
      %v86 = vrot.slane %v85, 4
      %v87 = vadd.f32 %v85, %v86
      %v88 = vrot.slane %v87, 2
      %v89 = vadd.f32 %v87, %v88
      %v90 = vrot.slane %v89, 1
      %v91 = vadd.f32 %v89, %v90
      %s92 = vtos %v91
      %s93 = smul.f32 %s92, 0.5
      %v94 = vstv %s93
      %v95 = vadd.f32 %v94, 0.0
      %96 = vst [vmem:[#allocation8] sm:$0xff] %v95
    $region25: #{tpu_custom_call.1} parent=1 // pred_fallthru
      _
    // Predicated region
    $region26: #{tpu_custom_call.1} parent=1 // pred_check
      _
    $region27: #{tpu_custom_call.1} parent=1 // pred_check_branch
      %98 = sbr.rel (0) target = $region29
    $region28: #{tpu_custom_call.1} parent=1 // pred_region
      %100 = vsyncadd [#allocation5], 0
      %s102 = sshll.u32 [#allocation8], 4
      %s103 = int_to_ptr.vmem [resolvable:$true] %s102
      %s104 = sshll.u32 %s2, 4
      %s105 = int_to_ptr.hbm [resolvable:$true] %s104
      %107 = dma.vmem_to_hbm [thread:$0]  %s103, 128, %s105, [#allocation5]
    $region29: #{tpu_custom_call.1} parent=1 // pred_fallthru
      _
    // Predicated region
    $region30: #{tpu_custom_call.1} parent=1 // pred_check
      _
    $region31: #{tpu_custom_call.1} parent=1 // pred_check_branch
      %109 = sbr.rel (0) target = $region33
    $region32: #{tpu_custom_call.1} parent=1 // pred_region
      %111 = dma.done [#allocation5], 128
    $region33: #{tpu_custom_call.1} parent=1 // pred_fallthru
      _
    %112 = vsyncpa [#allocation4], 1
    %113 = vsyncpa [#allocation7], 1
    %114 = vsyncpa [#allocation5], 1

</llo_original>
